<compile_context>
chip_gen: v5e
topology: v5e:2x2
jax: 0.10.0
libtpu: 0.0.40
codegen_flags: <defaults>
</compile_context>

<pallas_src>
import jax
import jax.numpy as jnp
from jax import lax
from jax.experimental import pallas as pl
from jax.experimental.pallas import tpu as pltpu


# -----------------------------------------------------------------------------
# Fused kernel: input projection (all timesteps at once) -> unrolled recurrence
# for BOTH LSTMs in lockstep -> fused FC epilogue.
# PyTorch gate order per LSTM: i, f, g, o; fused gate-major column layout:
#   [i1,i2 | f1,f2 | g1,g2 | o1,o2], each sub-block H lanes wide.
# -----------------------------------------------------------------------------
def fused_lstms_kernel(x_ref, w_in_ref, w_rec_ref, b_ref, fc_wt_ref, fc_b_ref,
                       out_ref, ig_scr):
    T, B, E2 = x_ref.shape
    H2 = w_rec_ref.shape[0]          # 2H (fused hidden width: [lstm1 | lstm2])
    G = w_rec_ref.shape[1]           # 8H (fused gate width)

    # ---- hoisted input projection for all timesteps: one matmul ------------
    x_flat = x_ref[...].reshape(T * B, E2)                          # (T*B, 2E)
    ig = jnp.dot(x_flat, w_in_ref[...],
                 preferred_element_type=jnp.float32) + b_ref[...]   # (T*B, 8H)
    ig_scr[...] = ig.reshape(T, B, G)

    w_rec = w_rec_ref[...]                                          # (2H, 8H)

    # ---- serial recurrence: only h @ W_hh^T + gate math per step -----------
    def step(t, carry):
        h, c = carry
        gates = ig_scr[t] + jnp.dot(h, w_rec,
                                    preferred_element_type=jnp.float32)  # (B, 8H)
        i = jax.nn.sigmoid(gates[:, 0 * H2:1 * H2])   # [i1 | i2]
        f = jax.nn.sigmoid(gates[:, 1 * H2:2 * H2])   # [f1 | f2]
        g = jnp.tanh(gates[:, 2 * H2:3 * H2])         # [g1 | g2]
        o = jax.nn.sigmoid(gates[:, 3 * H2:4 * H2])   # [o1 | o2]
        c_new = f * c + i * g
        h_new = o * jnp.tanh(c_new)
        return h_new, c_new

    h0 = jnp.zeros((B, H2), jnp.float32)
    c0 = jnp.zeros((B, H2), jnp.float32)
    _, c_fin = lax.fori_loop(0, T, step, (h0, c0), unroll=True)     # (B, 2H)

    # ---- fused FC epilogue: c_fin already is concat(c1, c2) lane layout ----
    out_ref[...] = (jnp.dot(c_fin, fc_wt_ref[...],
                            preferred_element_type=jnp.float32)
                    + fc_b_ref[...]).astype(out_ref.dtype)


# -----------------------------------------------------------------------------
# Weight fusion helpers (block-diagonal, gate-major column ordering).
# -----------------------------------------------------------------------------
def _fuse_input_weights(w_ih1, w_ih2, H):
    """w_ih*: (4H, E) PyTorch layout. Returns (2E, 8H)."""
    E = w_ih1.shape[1]
    w1 = jnp.transpose(w_ih1).reshape(E, 4, H)        # [e, gate, h]
    w2 = jnp.transpose(w_ih2).reshape(E, 4, H)
    z = jnp.zeros((E, 4, H), w_ih1.dtype)
    top = jnp.stack([w1, z], axis=2)                  # x1 rows -> lstm1 cols only
    bot = jnp.stack([z, w2], axis=2)                  # x2 rows -> lstm2 cols only
    return jnp.concatenate([top, bot], axis=0).reshape(2 * E, 8 * H)


def _fuse_recurrent_weights(w_hh1, w_hh2, H):
    """w_hh*: (4H, H) PyTorch layout. Returns (2H, 8H)."""
    w1 = jnp.transpose(w_hh1).reshape(H, 4, H)
    w2 = jnp.transpose(w_hh2).reshape(H, 4, H)
    z = jnp.zeros((H, 4, H), w_hh1.dtype)
    top = jnp.stack([w1, z], axis=2)                  # h1 rows -> lstm1 cols only
    bot = jnp.stack([z, w2], axis=2)                  # h2 rows -> lstm2 cols only
    return jnp.concatenate([top, bot], axis=0).reshape(2 * H, 8 * H)


def _fuse_bias(b1, b2, H):
    """b*: (4H,) already b_ih + b_hh. Returns (1, 8H)."""
    bb = jnp.stack([b1.reshape(4, H), b2.reshape(4, H)], axis=1)    # (4, 2, H)
    return bb.reshape(1, 8 * H)


# -----------------------------------------------------------------------------
# Model wrapper
# -----------------------------------------------------------------------------
def init_params(key, emb_dim, hidden_dim):
    """PyTorch-style uniform(-1/sqrt(H), 1/sqrt(H)) init, deterministic."""
    k = 1.0 / jnp.sqrt(jnp.float32(hidden_dim))
    keys = jax.random.split(key, 10)
    u = lambda kk, shape: jax.random.uniform(kk, shape, jnp.float32, -k, k)
    return {
        # LSTM1
        "w_ih1": u(keys[0], (4 * hidden_dim, emb_dim)),
        "w_hh1": u(keys[1], (4 * hidden_dim, hidden_dim)),
        "b_ih1": u(keys[2], (4 * hidden_dim,)),
        "b_hh1": u(keys[3], (4 * hidden_dim,)),
        # LSTM2
        "w_ih2": u(keys[4], (4 * hidden_dim, emb_dim)),
        "w_hh2": u(keys[5], (4 * hidden_dim, hidden_dim)),
        "b_ih2": u(keys[6], (4 * hidden_dim,)),
        "b_hh2": u(keys[7], (4 * hidden_dim,)),
        # fc: Linear(2H, 2)
        "fc_w": u(keys[8], (2, 2 * hidden_dim)),
        "fc_b": u(keys[9], (2,)),
    }


@jax.jit
def lstms_forward(params, x_claim, x_google):
    """x_claim, x_google: (B, T, E) batch-first (dense, equal-length)."""
    B, T, E = x_claim.shape
    H = params["w_hh1"].shape[1]

    # batch-first -> time-major; concat features so both LSTMs share one slab
    x1 = jnp.transpose(x_claim, (1, 0, 2))             # (T, B, E)
    x2 = jnp.transpose(x_google, (1, 0, 2))            # (T, B, E)
    x_cat = jnp.concatenate([x1, x2], axis=-1)         # (T, B, 2E)

    # pad batch up to the sublane height (8) -> unmasked vreg rows / stores
    Bp = max(8, ((B + 7) // 8) * 8)
    if Bp != B:
        x_cat = jnp.pad(x_cat, ((0, 0), (0, Bp - B), (0, 0)))

    # fused block-diagonal, gate-major weights (tiny; done under jit)
    w_in = _fuse_input_weights(params["w_ih1"], params["w_ih2"], H)       # (2E, 8H)
    w_rec = _fuse_recurrent_weights(params["w_hh1"], params["w_hh2"], H)  # (2H, 8H)
    b = _fuse_bias(params["b_ih1"] + params["b_hh1"],
                   params["b_ih2"] + params["b_hh2"], H)                  # (1, 8H)
    fc_wt = jnp.transpose(params["fc_w"])              # (2H, 2); rows = [c1 | c2]
    fc_b = params["fc_b"].reshape(1, 2)

    out = pl.pallas_call(
        fused_lstms_kernel,
        out_shape=jax.ShapeDtypeStruct((Bp, 2), jnp.float32),
        grid_spec=pltpu.PrefetchScalarGridSpec(
            num_scalar_prefetch=0,
            grid=(1,),                                   # single invocation
            in_specs=[
                pl.BlockSpec((T, Bp, 2 * E), lambda i: (0, 0, 0)),  # x slab
                pl.BlockSpec((2 * E, 8 * H), lambda i: (0, 0)),     # fused W_in
                pl.BlockSpec((2 * H, 8 * H), lambda i: (0, 0)),     # fused W_rec
                pl.BlockSpec((1, 8 * H), lambda i: (0, 0)),         # fused bias
                pl.BlockSpec((2 * H, 2), lambda i: (0, 0)),         # fc W^T
                pl.BlockSpec((1, 2), lambda i: (0, 0)),             # fc bias
            ],
            out_specs=pl.BlockSpec((Bp, 2), lambda i: (0, 0)),
            scratch_shapes=[
                pltpu.VMEM((T, Bp, 8 * H), jnp.float32),            # hoisted IG
            ],
        ),
        compiler_params=pltpu.CompilerParams(
            dimension_semantics=("arbitrary",)),
    )(x_cat, w_in, w_rec, b, fc_wt, fc_b)

    # sorted_indices == identity for dense equal-length batches
    return out[:B]


# -----------------------------------------------------------------------------
# Pure-JAX reference (for a loose numerical sanity check)
# -----------------------------------------------------------------------------
def _lstm_ref(x_bte, w_ih, w_hh, b_ih, b_hh):
    B, T, E = x_bte.shape
    H = w_hh.shape[1]
    hi = jax.lax.Precision.HIGHEST
    h = jnp.zeros((B, H), jnp.float32)
    c = jnp.zeros((B, H), jnp.float32)
    for t in range(T):
        g = (jnp.dot(x_bte[:, t], w_ih.T, precision=hi) + b_ih
             + jnp.dot(h, w_hh.T, precision=hi) + b_hh)
        i = jax.nn.sigmoid(g[:, 0 * H:1 * H])
        f = jax.nn.sigmoid(g[:, 1 * H:2 * H])
        gg = jnp.tanh(g[:, 2 * H:3 * H])
        o = jax.nn.sigmoid(g[:, 3 * H:4 * H])
        c = f * c + i * gg
        h = o * jnp.tanh(c)
    return c


def _forward_ref(params, x1, x2):
    hi = jax.lax.Precision.HIGHEST
    c1 = _lstm_ref(x1, params["w_ih1"], params["w_hh1"],
                   params["b_ih1"], params["b_hh1"])
    c2 = _lstm_ref(x2, params["w_ih2"], params["w_hh2"],
                   params["b_ih2"], params["b_hh2"])
    merged = jnp.concatenate([c1, c2], axis=1)
    return jnp.dot(merged, params["fc_w"].T, precision=hi) + params["fc_b"]


if __name__ == "__main__":
    emb_dim, hidden_dim, num_layers, batch, seq = 16, 32, 1, 2, 8

    key = jax.random.PRNGKey(0)
    kp, k1, k2 = jax.random.split(key, 3)
    params = init_params(kp, emb_dim, hidden_dim)

    x_claim = jax.random.normal(k1, (batch, seq, emb_dim), jnp.float32)
    x_google = jax.random.normal(k2, (batch, seq, emb_dim), jnp.float32)

    out = lstms_forward(params, x_claim, x_google)
    jax.block_until_ready(out)
    assert out.shape == (batch, 2)

    ref = _forward_ref(params, x_claim, x_google)
    max_err = float(jnp.max(jnp.abs(out - ref)))
    assert max_err < 1e-2, f"mismatch vs reference: {max_err}"

    print("KERNEL_OK")
</pallas_src>

<mosaic_0001>
module attributes {stable_mosaic.version = 11 : i64} {
  func.func @fused_lstms_kernel(%arg0: i32, %arg1: memref<8x8x32xf32, #tpu.memory_space<vmem>>, %arg2: memref<32x256xf32, #tpu.memory_space<vmem>>, %arg3: memref<64x256xf32, #tpu.memory_space<vmem>>, %arg4: memref<1x256xf32, #tpu.memory_space<vmem>>, %arg5: memref<64x2xf32, #tpu.memory_space<vmem>>, %arg6: memref<1x2xf32, #tpu.memory_space<vmem>>, %arg7: memref<8x2xf32, #tpu.memory_space<vmem>>, %arg8: memref<8x8x256xf32, #tpu.memory_space<vmem>>) attributes {dimension_semantics = [#tpu.dimension_semantics<arbitrary>], iteration_bounds = array<i64: 1>, scalar_prefetch = 0 : i64, scratch_operands = 1 : i64, tpu.core_type = #tpu.core_type<tc>, window_params = [{pipeline_mode = #tpu.pipeline_mode<synchronous>, transform_indices = @transform_0, window_bounds = array<i64: 8, 8, 32>}, {pipeline_mode = #tpu.pipeline_mode<synchronous>, transform_indices = @transform_1, window_bounds = array<i64: 32, 256>}, {pipeline_mode = #tpu.pipeline_mode<synchronous>, transform_indices = @transform_2, window_bounds = array<i64: 64, 256>}, {pipeline_mode = #tpu.pipeline_mode<synchronous>, transform_indices = @transform_3, window_bounds = array<i64: 1, 256>}, {pipeline_mode = #tpu.pipeline_mode<synchronous>, transform_indices = @transform_4, window_bounds = array<i64: 64, 2>}, {pipeline_mode = #tpu.pipeline_mode<synchronous>, transform_indices = @transform_5, window_bounds = array<i64: 1, 2>}, {pipeline_mode = #tpu.pipeline_mode<synchronous>, transform_indices = @transform_6, window_bounds = array<i64: 8, 2>}]} {
    %c0 = arith.constant 0 : index
    %c0_0 = arith.constant 0 : index
    %c0_1 = arith.constant 0 : index
    %0 = vector.load %arg1[%c0, %c0_0, %c0_1] : memref<8x8x32xf32, #tpu.memory_space<vmem>>, vector<8x8x32xf32>
    %1 = vector.shape_cast %0 : vector<8x8x32xf32> to vector<64x32xf32>
    %c0_2 = arith.constant 0 : index
    %c0_3 = arith.constant 0 : index
    %2 = vector.load %arg2[%c0_2, %c0_3] : memref<32x256xf32, #tpu.memory_space<vmem>>, vector<32x256xf32>
    %cst = arith.constant dense<0.000000e+00> : vector<64x256xf32>
    %3 = tpu.matmul %1, %2, %cst {dimension_numbers = #tpu.dot_dimension_numbers<[1], [0], [0], [1], [0, 0, 1, 1], [], []>} : vector<64x32xf32>, vector<32x256xf32>, vector<64x256xf32> -> vector<64x256xf32>
    %c0_4 = arith.constant 0 : index
    %c0_5 = arith.constant 0 : index
    %4 = vector.load %arg4[%c0_4, %c0_5] : memref<1x256xf32, #tpu.memory_space<vmem>>, vector<1x256xf32>
    %5 = vector.broadcast %4 : vector<1x256xf32> to vector<64x256xf32>
    %6 = arith.addf %3, %5 : vector<64x256xf32>
    %7 = vector.shape_cast %6 : vector<64x256xf32> to vector<8x8x256xf32>
    %c0_6 = arith.constant 0 : index
    %c0_7 = arith.constant 0 : index
    %c0_8 = arith.constant 0 : index
    %8 = vector.load %arg8[%c0_6, %c0_7, %c0_8] : memref<8x8x256xf32, #tpu.memory_space<vmem>>, vector<8x8x256xf32>
    tpu.vector_store %arg8[%c0_6, %c0_7, %c0_8], %7 {strides = array<i32>} : memref<8x8x256xf32, #tpu.memory_space<vmem>>, vector<8x8x256xf32>,
    %c0_9 = arith.constant 0 : index
    %c0_10 = arith.constant 0 : index
    %9 = vector.load %arg3[%c0_9, %c0_10] : memref<64x256xf32, #tpu.memory_space<vmem>>, vector<64x256xf32>
    %cst_11 = arith.constant 0.000000e+00 : f32
    %10 = vector.broadcast %cst_11 : f32 to vector<8x64xf32>
    %cst_12 = arith.constant 0.000000e+00 : f32
    %11 = vector.broadcast %cst_12 : f32 to vector<8x64xf32>
    %c0_i32 = arith.constant 0 : i32
    %12 = arith.index_cast %c0_i32 : i32 to index
    %c0_13 = arith.constant 0 : index
    %c0_14 = arith.constant 0 : index
    %13 = vector.load %arg8[%12, %c0_13, %c0_14] : memref<8x8x256xf32, #tpu.memory_space<vmem>>, vector<1x8x256xf32>
    %14 = vector.shape_cast %13 : vector<1x8x256xf32> to vector<8x256xf32>
    %cst_15 = arith.constant dense<0.000000e+00> : vector<8x256xf32>
    %15 = tpu.matmul %10, %9, %cst_15 {dimension_numbers = #tpu.dot_dimension_numbers<[1], [0], [0], [1], [0, 0, 1, 1], [], []>} : vector<8x64xf32>, vector<64x256xf32>, vector<8x256xf32> -> vector<8x256xf32>
    %16 = arith.addf %14, %15 : vector<8x256xf32>
    %17 = vector.extract_strided_slice %16 {offsets = [0, 0], sizes = [8, 64], strides = [1, 1]} : vector<8x256xf32> to vector<8x64xf32>
    %18 = arith.negf %17 : vector<8x64xf32>
    %19 = math.exp %18 : vector<8x64xf32>
    %cst_16 = arith.constant 1.000000e+00 : f32
    %20 = vector.broadcast %cst_16 : f32 to vector<8x64xf32>
    %21 = arith.addf %20, %19 : vector<8x64xf32>
    %22 = arith.divf %20, %21 : vector<8x64xf32>
    %23 = vector.extract_strided_slice %16 {offsets = [0, 64], sizes = [8, 64], strides = [1, 1]} : vector<8x256xf32> to vector<8x64xf32>
    %24 = arith.negf %23 : vector<8x64xf32>
    %25 = math.exp %24 : vector<8x64xf32>
    %cst_17 = arith.constant 1.000000e+00 : f32
    %26 = vector.broadcast %cst_17 : f32 to vector<8x64xf32>
    %27 = arith.addf %26, %25 : vector<8x64xf32>
    %28 = arith.divf %26, %27 : vector<8x64xf32>
    %29 = vector.extract_strided_slice %16 {offsets = [0, 128], sizes = [8, 64], strides = [1, 1]} : vector<8x256xf32> to vector<8x64xf32>
    %30 = math.tanh %29 : vector<8x64xf32>
    %31 = vector.extract_strided_slice %16 {offsets = [0, 192], sizes = [8, 64], strides = [1, 1]} : vector<8x256xf32> to vector<8x64xf32>
    %32 = arith.negf %31 : vector<8x64xf32>
    %33 = math.exp %32 : vector<8x64xf32>
    %cst_18 = arith.constant 1.000000e+00 : f32
    %34 = vector.broadcast %cst_18 : f32 to vector<8x64xf32>
    %35 = arith.addf %34, %33 : vector<8x64xf32>
    %36 = arith.divf %34, %35 : vector<8x64xf32>
    %37 = arith.mulf %28, %11 : vector<8x64xf32>
    %38 = arith.mulf %22, %30 : vector<8x64xf32>
    %39 = arith.addf %37, %38 : vector<8x64xf32>
    %40 = math.tanh %39 : vector<8x64xf32>
    %41 = arith.mulf %36, %40 : vector<8x64xf32>
    %c1_i32 = arith.constant 1 : i32
    %42 = arith.index_cast %c1_i32 : i32 to index
    %c0_19 = arith.constant 0 : index
    %c0_20 = arith.constant 0 : index
    %43 = vector.load %arg8[%42, %c0_19, %c0_20] : memref<8x8x256xf32, #tpu.memory_space<vmem>>, vector<1x8x256xf32>
    %44 = vector.shape_cast %43 : vector<1x8x256xf32> to vector<8x256xf32>
    %cst_21 = arith.constant dense<0.000000e+00> : vector<8x256xf32>
    %45 = tpu.matmul %41, %9, %cst_21 {dimension_numbers = #tpu.dot_dimension_numbers<[1], [0], [0], [1], [0, 0, 1, 1], [], []>} : vector<8x64xf32>, vector<64x256xf32>, vector<8x256xf32> -> vector<8x256xf32>
    %46 = arith.addf %44, %45 : vector<8x256xf32>
    %47 = vector.extract_strided_slice %46 {offsets = [0, 0], sizes = [8, 64], strides = [1, 1]} : vector<8x256xf32> to vector<8x64xf32>
    %48 = arith.negf %47 : vector<8x64xf32>
    %49 = math.exp %48 : vector<8x64xf32>
    %cst_22 = arith.constant 1.000000e+00 : f32
    %50 = vector.broadcast %cst_22 : f32 to vector<8x64xf32>
    %51 = arith.addf %50, %49 : vector<8x64xf32>
    %52 = arith.divf %50, %51 : vector<8x64xf32>
    %53 = vector.extract_strided_slice %46 {offsets = [0, 64], sizes = [8, 64], strides = [1, 1]} : vector<8x256xf32> to vector<8x64xf32>
    %54 = arith.negf %53 : vector<8x64xf32>
    %55 = math.exp %54 : vector<8x64xf32>
    %cst_23 = arith.constant 1.000000e+00 : f32
    %56 = vector.broadcast %cst_23 : f32 to vector<8x64xf32>
    %57 = arith.addf %56, %55 : vector<8x64xf32>
    %58 = arith.divf %56, %57 : vector<8x64xf32>
    %59 = vector.extract_strided_slice %46 {offsets = [0, 128], sizes = [8, 64], strides = [1, 1]} : vector<8x256xf32> to vector<8x64xf32>
    %60 = math.tanh %59 : vector<8x64xf32>
    %61 = vector.extract_strided_slice %46 {offsets = [0, 192], sizes = [8, 64], strides = [1, 1]} : vector<8x256xf32> to vector<8x64xf32>
    %62 = arith.negf %61 : vector<8x64xf32>
    %63 = math.exp %62 : vector<8x64xf32>
    %cst_24 = arith.constant 1.000000e+00 : f32
    %64 = vector.broadcast %cst_24 : f32 to vector<8x64xf32>
    %65 = arith.addf %64, %63 : vector<8x64xf32>
    %66 = arith.divf %64, %65 : vector<8x64xf32>
    %67 = arith.mulf %58, %39 : vector<8x64xf32>
    %68 = arith.mulf %52, %60 : vector<8x64xf32>
    %69 = arith.addf %67, %68 : vector<8x64xf32>
    %70 = math.tanh %69 : vector<8x64xf32>
    %71 = arith.mulf %66, %70 : vector<8x64xf32>
    %c2_i32 = arith.constant 2 : i32
    %72 = arith.index_cast %c2_i32 : i32 to index
    %c0_25 = arith.constant 0 : index
    %c0_26 = arith.constant 0 : index
    %73 = vector.load %arg8[%72, %c0_25, %c0_26] : memref<8x8x256xf32, #tpu.memory_space<vmem>>, vector<1x8x256xf32>
    %74 = vector.shape_cast %73 : vector<1x8x256xf32> to vector<8x256xf32>
    %cst_27 = arith.constant dense<0.000000e+00> : vector<8x256xf32>
    %75 = tpu.matmul %71, %9, %cst_27 {dimension_numbers = #tpu.dot_dimension_numbers<[1], [0], [0], [1], [0, 0, 1, 1], [], []>} : vector<8x64xf32>, vector<64x256xf32>, vector<8x256xf32> -> vector<8x256xf32>
    %76 = arith.addf %74, %75 : vector<8x256xf32>
    %77 = vector.extract_strided_slice %76 {offsets = [0, 0], sizes = [8, 64], strides = [1, 1]} : vector<8x256xf32> to vector<8x64xf32>
    %78 = arith.negf %77 : vector<8x64xf32>
    %79 = math.exp %78 : vector<8x64xf32>
    %cst_28 = arith.constant 1.000000e+00 : f32
    %80 = vector.broadcast %cst_28 : f32 to vector<8x64xf32>
    %81 = arith.addf %80, %79 : vector<8x64xf32>
    %82 = arith.divf %80, %81 : vector<8x64xf32>
    %83 = vector.extract_strided_slice %76 {offsets = [0, 64], sizes = [8, 64], strides = [1, 1]} : vector<8x256xf32> to vector<8x64xf32>
    %84 = arith.negf %83 : vector<8x64xf32>
    %85 = math.exp %84 : vector<8x64xf32>
    %cst_29 = arith.constant 1.000000e+00 : f32
    %86 = vector.broadcast %cst_29 : f32 to vector<8x64xf32>
    %87 = arith.addf %86, %85 : vector<8x64xf32>
    %88 = arith.divf %86, %87 : vector<8x64xf32>
    %89 = vector.extract_strided_slice %76 {offsets = [0, 128], sizes = [8, 64], strides = [1, 1]} : vector<8x256xf32> to vector<8x64xf32>
    %90 = math.tanh %89 : vector<8x64xf32>
    %91 = vector.extract_strided_slice %76 {offsets = [0, 192], sizes = [8, 64], strides = [1, 1]} : vector<8x256xf32> to vector<8x64xf32>
    %92 = arith.negf %91 : vector<8x64xf32>
    %93 = math.exp %92 : vector<8x64xf32>
    %cst_30 = arith.constant 1.000000e+00 : f32
    %94 = vector.broadcast %cst_30 : f32 to vector<8x64xf32>
    %95 = arith.addf %94, %93 : vector<8x64xf32>
    %96 = arith.divf %94, %95 : vector<8x64xf32>
    %97 = arith.mulf %88, %69 : vector<8x64xf32>
    %98 = arith.mulf %82, %90 : vector<8x64xf32>
    %99 = arith.addf %97, %98 : vector<8x64xf32>
    %100 = math.tanh %99 : vector<8x64xf32>
    %101 = arith.mulf %96, %100 : vector<8x64xf32>
    %c3_i32 = arith.constant 3 : i32
    %102 = arith.index_cast %c3_i32 : i32 to index
    %c0_31 = arith.constant 0 : index
    %c0_32 = arith.constant 0 : index
    %103 = vector.load %arg8[%102, %c0_31, %c0_32] : memref<8x8x256xf32, #tpu.memory_space<vmem>>, vector<1x8x256xf32>
    %104 = vector.shape_cast %103 : vector<1x8x256xf32> to vector<8x256xf32>
    %cst_33 = arith.constant dense<0.000000e+00> : vector<8x256xf32>
    %105 = tpu.matmul %101, %9, %cst_33 {dimension_numbers = #tpu.dot_dimension_numbers<[1], [0], [0], [1], [0, 0, 1, 1], [], []>} : vector<8x64xf32>, vector<64x256xf32>, vector<8x256xf32> -> vector<8x256xf32>
    %106 = arith.addf %104, %105 : vector<8x256xf32>
    %107 = vector.extract_strided_slice %106 {offsets = [0, 0], sizes = [8, 64], strides = [1, 1]} : vector<8x256xf32> to vector<8x64xf32>
    %108 = arith.negf %107 : vector<8x64xf32>
    %109 = math.exp %108 : vector<8x64xf32>
    %cst_34 = arith.constant 1.000000e+00 : f32
    %110 = vector.broadcast %cst_34 : f32 to vector<8x64xf32>
    %111 = arith.addf %110, %109 : vector<8x64xf32>
    %112 = arith.divf %110, %111 : vector<8x64xf32>
    %113 = vector.extract_strided_slice %106 {offsets = [0, 64], sizes = [8, 64], strides = [1, 1]} : vector<8x256xf32> to vector<8x64xf32>
    %114 = arith.negf %113 : vector<8x64xf32>
    %115 = math.exp %114 : vector<8x64xf32>
    %cst_35 = arith.constant 1.000000e+00 : f32
    %116 = vector.broadcast %cst_35 : f32 to vector<8x64xf32>
    %117 = arith.addf %116, %115 : vector<8x64xf32>
    %118 = arith.divf %116, %117 : vector<8x64xf32>
    %119 = vector.extract_strided_slice %106 {offsets = [0, 128], sizes = [8, 64], strides = [1, 1]} : vector<8x256xf32> to vector<8x64xf32>
    %120 = math.tanh %119 : vector<8x64xf32>
    %121 = vector.extract_strided_slice %106 {offsets = [0, 192], sizes = [8, 64], strides = [1, 1]} : vector<8x256xf32> to vector<8x64xf32>
    %122 = arith.negf %121 : vector<8x64xf32>
    %123 = math.exp %122 : vector<8x64xf32>
    %cst_36 = arith.constant 1.000000e+00 : f32
    %124 = vector.broadcast %cst_36 : f32 to vector<8x64xf32>
    %125 = arith.addf %124, %123 : vector<8x64xf32>
    %126 = arith.divf %124, %125 : vector<8x64xf32>
    %127 = arith.mulf %118, %99 : vector<8x64xf32>
    %128 = arith.mulf %112, %120 : vector<8x64xf32>
    %129 = arith.addf %127, %128 : vector<8x64xf32>
    %130 = math.tanh %129 : vector<8x64xf32>
    %131 = arith.mulf %126, %130 : vector<8x64xf32>
    %c4_i32 = arith.constant 4 : i32
    %132 = arith.index_cast %c4_i32 : i32 to index
    %c0_37 = arith.constant 0 : index
    %c0_38 = arith.constant 0 : index
    %133 = vector.load %arg8[%132, %c0_37, %c0_38] : memref<8x8x256xf32, #tpu.memory_space<vmem>>, vector<1x8x256xf32>
    %134 = vector.shape_cast %133 : vector<1x8x256xf32> to vector<8x256xf32>
    %cst_39 = arith.constant dense<0.000000e+00> : vector<8x256xf32>
    %135 = tpu.matmul %131, %9, %cst_39 {dimension_numbers = #tpu.dot_dimension_numbers<[1], [0], [0], [1], [0, 0, 1, 1], [], []>} : vector<8x64xf32>, vector<64x256xf32>, vector<8x256xf32> -> vector<8x256xf32>
    %136 = arith.addf %134, %135 : vector<8x256xf32>
    %137 = vector.extract_strided_slice %136 {offsets = [0, 0], sizes = [8, 64], strides = [1, 1]} : vector<8x256xf32> to vector<8x64xf32>
    %138 = arith.negf %137 : vector<8x64xf32>
    %139 = math.exp %138 : vector<8x64xf32>
    %cst_40 = arith.constant 1.000000e+00 : f32
    %140 = vector.broadcast %cst_40 : f32 to vector<8x64xf32>
    %141 = arith.addf %140, %139 : vector<8x64xf32>
    %142 = arith.divf %140, %141 : vector<8x64xf32>
    %143 = vector.extract_strided_slice %136 {offsets = [0, 64], sizes = [8, 64], strides = [1, 1]} : vector<8x256xf32> to vector<8x64xf32>
    %144 = arith.negf %143 : vector<8x64xf32>
    %145 = math.exp %144 : vector<8x64xf32>
    %cst_41 = arith.constant 1.000000e+00 : f32
    %146 = vector.broadcast %cst_41 : f32 to vector<8x64xf32>
    %147 = arith.addf %146, %145 : vector<8x64xf32>
    %148 = arith.divf %146, %147 : vector<8x64xf32>
    %149 = vector.extract_strided_slice %136 {offsets = [0, 128], sizes = [8, 64], strides = [1, 1]} : vector<8x256xf32> to vector<8x64xf32>
    %150 = math.tanh %149 : vector<8x64xf32>
    %151 = vector.extract_strided_slice %136 {offsets = [0, 192], sizes = [8, 64], strides = [1, 1]} : vector<8x256xf32> to vector<8x64xf32>
    %152 = arith.negf %151 : vector<8x64xf32>
    %153 = math.exp %152 : vector<8x64xf32>
    %cst_42 = arith.constant 1.000000e+00 : f32
    %154 = vector.broadcast %cst_42 : f32 to vector<8x64xf32>
    %155 = arith.addf %154, %153 : vector<8x64xf32>
    %156 = arith.divf %154, %155 : vector<8x64xf32>
    %157 = arith.mulf %148, %129 : vector<8x64xf32>
    %158 = arith.mulf %142, %150 : vector<8x64xf32>
    %159 = arith.addf %157, %158 : vector<8x64xf32>
    %160 = math.tanh %159 : vector<8x64xf32>
    %161 = arith.mulf %156, %160 : vector<8x64xf32>
    %c5_i32 = arith.constant 5 : i32
    %162 = arith.index_cast %c5_i32 : i32 to index
    %c0_43 = arith.constant 0 : index
    %c0_44 = arith.constant 0 : index
    %163 = vector.load %arg8[%162, %c0_43, %c0_44] : memref<8x8x256xf32, #tpu.memory_space<vmem>>, vector<1x8x256xf32>
    %164 = vector.shape_cast %163 : vector<1x8x256xf32> to vector<8x256xf32>
    %cst_45 = arith.constant dense<0.000000e+00> : vector<8x256xf32>
    %165 = tpu.matmul %161, %9, %cst_45 {dimension_numbers = #tpu.dot_dimension_numbers<[1], [0], [0], [1], [0, 0, 1, 1], [], []>} : vector<8x64xf32>, vector<64x256xf32>, vector<8x256xf32> -> vector<8x256xf32>
    %166 = arith.addf %164, %165 : vector<8x256xf32>
    %167 = vector.extract_strided_slice %166 {offsets = [0, 0], sizes = [8, 64], strides = [1, 1]} : vector<8x256xf32> to vector<8x64xf32>
    %168 = arith.negf %167 : vector<8x64xf32>
    %169 = math.exp %168 : vector<8x64xf32>
    %cst_46 = arith.constant 1.000000e+00 : f32
    %170 = vector.broadcast %cst_46 : f32 to vector<8x64xf32>
    %171 = arith.addf %170, %169 : vector<8x64xf32>
    %172 = arith.divf %170, %171 : vector<8x64xf32>
    %173 = vector.extract_strided_slice %166 {offsets = [0, 64], sizes = [8, 64], strides = [1, 1]} : vector<8x256xf32> to vector<8x64xf32>
    %174 = arith.negf %173 : vector<8x64xf32>
    %175 = math.exp %174 : vector<8x64xf32>
    %cst_47 = arith.constant 1.000000e+00 : f32
    %176 = vector.broadcast %cst_47 : f32 to vector<8x64xf32>
    %177 = arith.addf %176, %175 : vector<8x64xf32>
    %178 = arith.divf %176, %177 : vector<8x64xf32>
    %179 = vector.extract_strided_slice %166 {offsets = [0, 128], sizes = [8, 64], strides = [1, 1]} : vector<8x256xf32> to vector<8x64xf32>
    %180 = math.tanh %179 : vector<8x64xf32>
    %181 = vector.extract_strided_slice %166 {offsets = [0, 192], sizes = [8, 64], strides = [1, 1]} : vector<8x256xf32> to vector<8x64xf32>
    %182 = arith.negf %181 : vector<8x64xf32>
    %183 = math.exp %182 : vector<8x64xf32>
    %cst_48 = arith.constant 1.000000e+00 : f32
    %184 = vector.broadcast %cst_48 : f32 to vector<8x64xf32>
    %185 = arith.addf %184, %183 : vector<8x64xf32>
    %186 = arith.divf %184, %185 : vector<8x64xf32>
    %187 = arith.mulf %178, %159 : vector<8x64xf32>
    %188 = arith.mulf %172, %180 : vector<8x64xf32>
    %189 = arith.addf %187, %188 : vector<8x64xf32>
    %190 = math.tanh %189 : vector<8x64xf32>
    %191 = arith.mulf %186, %190 : vector<8x64xf32>
    %c6_i32 = arith.constant 6 : i32
    %192 = arith.index_cast %c6_i32 : i32 to index
    %c0_49 = arith.constant 0 : index
    %c0_50 = arith.constant 0 : index
    %193 = vector.load %arg8[%192, %c0_49, %c0_50] : memref<8x8x256xf32, #tpu.memory_space<vmem>>, vector<1x8x256xf32>
    %194 = vector.shape_cast %193 : vector<1x8x256xf32> to vector<8x256xf32>
    %cst_51 = arith.constant dense<0.000000e+00> : vector<8x256xf32>
    %195 = tpu.matmul %191, %9, %cst_51 {dimension_numbers = #tpu.dot_dimension_numbers<[1], [0], [0], [1], [0, 0, 1, 1], [], []>} : vector<8x64xf32>, vector<64x256xf32>, vector<8x256xf32> -> vector<8x256xf32>
    %196 = arith.addf %194, %195 : vector<8x256xf32>
    %197 = vector.extract_strided_slice %196 {offsets = [0, 0], sizes = [8, 64], strides = [1, 1]} : vector<8x256xf32> to vector<8x64xf32>
    %198 = arith.negf %197 : vector<8x64xf32>
    %199 = math.exp %198 : vector<8x64xf32>
    %cst_52 = arith.constant 1.000000e+00 : f32
    %200 = vector.broadcast %cst_52 : f32 to vector<8x64xf32>
    %201 = arith.addf %200, %199 : vector<8x64xf32>
    %202 = arith.divf %200, %201 : vector<8x64xf32>
    %203 = vector.extract_strided_slice %196 {offsets = [0, 64], sizes = [8, 64], strides = [1, 1]} : vector<8x256xf32> to vector<8x64xf32>
    %204 = arith.negf %203 : vector<8x64xf32>
    %205 = math.exp %204 : vector<8x64xf32>
    %cst_53 = arith.constant 1.000000e+00 : f32
    %206 = vector.broadcast %cst_53 : f32 to vector<8x64xf32>
    %207 = arith.addf %206, %205 : vector<8x64xf32>
    %208 = arith.divf %206, %207 : vector<8x64xf32>
    %209 = vector.extract_strided_slice %196 {offsets = [0, 128], sizes = [8, 64], strides = [1, 1]} : vector<8x256xf32> to vector<8x64xf32>
    %210 = math.tanh %209 : vector<8x64xf32>
    %211 = vector.extract_strided_slice %196 {offsets = [0, 192], sizes = [8, 64], strides = [1, 1]} : vector<8x256xf32> to vector<8x64xf32>
    %212 = arith.negf %211 : vector<8x64xf32>
    %213 = math.exp %212 : vector<8x64xf32>
    %cst_54 = arith.constant 1.000000e+00 : f32
    %214 = vector.broadcast %cst_54 : f32 to vector<8x64xf32>
    %215 = arith.addf %214, %213 : vector<8x64xf32>
    %216 = arith.divf %214, %215 : vector<8x64xf32>
    %217 = arith.mulf %208, %189 : vector<8x64xf32>
    %218 = arith.mulf %202, %210 : vector<8x64xf32>
    %219 = arith.addf %217, %218 : vector<8x64xf32>
    %220 = math.tanh %219 : vector<8x64xf32>
    %221 = arith.mulf %216, %220 : vector<8x64xf32>
    %c7_i32 = arith.constant 7 : i32
    %222 = arith.index_cast %c7_i32 : i32 to index
    %c0_55 = arith.constant 0 : index
    %c0_56 = arith.constant 0 : index
    %223 = vector.load %arg8[%222, %c0_55, %c0_56] : memref<8x8x256xf32, #tpu.memory_space<vmem>>, vector<1x8x256xf32>
    %224 = vector.shape_cast %223 : vector<1x8x256xf32> to vector<8x256xf32>
    %cst_57 = arith.constant dense<0.000000e+00> : vector<8x256xf32>
    %225 = tpu.matmul %221, %9, %cst_57 {dimension_numbers = #tpu.dot_dimension_numbers<[1], [0], [0], [1], [0, 0, 1, 1], [], []>} : vector<8x64xf32>, vector<64x256xf32>, vector<8x256xf32> -> vector<8x256xf32>
    %226 = arith.addf %224, %225 : vector<8x256xf32>
    %227 = vector.extract_strided_slice %226 {offsets = [0, 0], sizes = [8, 64], strides = [1, 1]} : vector<8x256xf32> to vector<8x64xf32>
    %228 = arith.negf %227 : vector<8x64xf32>
    %229 = math.exp %228 : vector<8x64xf32>
    %cst_58 = arith.constant 1.000000e+00 : f32
    %230 = vector.broadcast %cst_58 : f32 to vector<8x64xf32>
    %231 = arith.addf %230, %229 : vector<8x64xf32>
    %232 = arith.divf %230, %231 : vector<8x64xf32>
    %233 = vector.extract_strided_slice %226 {offsets = [0, 64], sizes = [8, 64], strides = [1, 1]} : vector<8x256xf32> to vector<8x64xf32>
    %234 = arith.negf %233 : vector<8x64xf32>
    %235 = math.exp %234 : vector<8x64xf32>
    %cst_59 = arith.constant 1.000000e+00 : f32
    %236 = vector.broadcast %cst_59 : f32 to vector<8x64xf32>
    %237 = arith.addf %236, %235 : vector<8x64xf32>
    %238 = arith.divf %236, %237 : vector<8x64xf32>
    %239 = vector.extract_strided_slice %226 {offsets = [0, 128], sizes = [8, 64], strides = [1, 1]} : vector<8x256xf32> to vector<8x64xf32>
    %240 = math.tanh %239 : vector<8x64xf32>
    %241 = vector.extract_strided_slice %226 {offsets = [0, 192], sizes = [8, 64], strides = [1, 1]} : vector<8x256xf32> to vector<8x64xf32>
    %242 = arith.negf %241 : vector<8x64xf32>
    %243 = math.exp %242 : vector<8x64xf32>
    %cst_60 = arith.constant 1.000000e+00 : f32
    %244 = vector.broadcast %cst_60 : f32 to vector<8x64xf32>
    %245 = arith.addf %244, %243 : vector<8x64xf32>
    %246 = arith.divf %244, %245 : vector<8x64xf32>
    %247 = arith.mulf %238, %219 : vector<8x64xf32>
    %248 = arith.mulf %232, %240 : vector<8x64xf32>
    %249 = arith.addf %247, %248 : vector<8x64xf32>
    %250 = math.tanh %249 : vector<8x64xf32>
    %251 = arith.mulf %246, %250 : vector<8x64xf32>
    %c8_i32 = arith.constant 8 : i32
    %c0_61 = arith.constant 0 : index
    %c0_62 = arith.constant 0 : index
    %252 = vector.load %arg5[%c0_61, %c0_62] : memref<64x2xf32, #tpu.memory_space<vmem>>, vector<64x2xf32>
    %cst_63 = arith.constant dense<0.000000e+00> : vector<8x2xf32>
    %253 = tpu.matmul %249, %252, %cst_63 {dimension_numbers = #tpu.dot_dimension_numbers<[1], [0], [0], [1], [0, 0, 1, 1], [], []>} : vector<8x64xf32>, vector<64x2xf32>, vector<8x2xf32> -> vector<8x2xf32>
    %c0_64 = arith.constant 0 : index
    %c0_65 = arith.constant 0 : index
    %254 = vector.load %arg6[%c0_64, %c0_65] : memref<1x2xf32, #tpu.memory_space<vmem>>, vector<1x2xf32>
    %255 = vector.broadcast %254 : vector<1x2xf32> to vector<8x2xf32>
    %256 = arith.addf %253, %255 : vector<8x2xf32>
    %c0_66 = arith.constant 0 : index
    %c0_67 = arith.constant 0 : index
    %257 = vector.load %arg7[%c0_66, %c0_67] : memref<8x2xf32, #tpu.memory_space<vmem>>, vector<8x2xf32>
    tpu.vector_store %arg7[%c0_66, %c0_67], %256 {strides = array<i32>} : memref<8x2xf32, #tpu.memory_space<vmem>>, vector<8x2xf32>,
    return
  }
  func.func @transform_0(%arg0: i32) -> (i32, i32, i32) {
    %c0_i32 = arith.constant 0 : i32
    %c0_i32_0 = arith.constant 0 : i32
    %c0_i32_1 = arith.constant 0 : i32
    %c0_i32_2 = arith.constant 0 : i32
    return %c0_i32, %c0_i32_0, %c0_i32_1 : i32, i32, i32
  }
  func.func @transform_1(%arg0: i32) -> (i32, i32) {
    %c0_i32 = arith.constant 0 : i32
    %c0_i32_0 = arith.constant 0 : i32
    %c0_i32_1 = arith.constant 0 : i32
    return %c0_i32, %c0_i32_0 : i32, i32
  }
  func.func @transform_2(%arg0: i32) -> (i32, i32) {
    %c0_i32 = arith.constant 0 : i32
    %c0_i32_0 = arith.constant 0 : i32
    %c0_i32_1 = arith.constant 0 : i32
    return %c0_i32, %c0_i32_0 : i32, i32
  }
  func.func @transform_3(%arg0: i32) -> (i32, i32) {
    %c0_i32 = arith.constant 0 : i32
    %c0_i32_0 = arith.constant 0 : i32
    %c0_i32_1 = arith.constant 0 : i32
    return %c0_i32, %c0_i32_0 : i32, i32
  }
  func.func @transform_4(%arg0: i32) -> (i32, i32) {
    %c0_i32 = arith.constant 0 : i32
    %c0_i32_0 = arith.constant 0 : i32
    %c0_i32_1 = arith.constant 0 : i32
    return %c0_i32, %c0_i32_0 : i32, i32
  }
  func.func @transform_5(%arg0: i32) -> (i32, i32) {
    %c0_i32 = arith.constant 0 : i32
    %c0_i32_0 = arith.constant 0 : i32
    %c0_i32_1 = arith.constant 0 : i32
    return %c0_i32, %c0_i32_0 : i32, i32
  }
  func.func @transform_6(%arg0: i32) -> (i32, i32) {
    %c0_i32 = arith.constant 0 : i32
    %c0_i32_0 = arith.constant 0 : i32
    %c0_i32_1 = arith.constant 0 : i32
    return %c0_i32, %c0_i32_0 : i32, i32
  }
}

</mosaic_0001>

<llo_original>
// kernel: lstms_forward.1
$region0: #{lstms_forward.1}
  #allocation0 [shape = 'u32[]', space=smem, size = 0x4, offset = 0x4, fixed_abs, tag = 'smem constant byte address 0x4 - core index']
  #allocation1 [shape = 'u32[72,128]{1,0:T(1,128)}', space=vmem, size = 0x9000, scoped, tag = 'internal scratch']
  #allocation2 [shape = 'f32[8,8,256]{2,1,0:T(8,128)}', space=vmem, size = 0x10000, scoped, tag = 'scratch operand']
  %s0 = inlined_call_operand.vmem [shape: f32[8,8,32], index: 0, kind: input, shape index: {}]
  %s1 = inlined_call_operand.vmem [shape: f32[32,256], index: 1, kind: input, shape index: {}]
  %s2 = inlined_call_operand.vmem [shape: f32[64,256], index: 2, kind: input, shape index: {}]
  %s3 = inlined_call_operand.vmem [shape: f32[1,256], index: 3, kind: input, shape index: {}]
  %s4 = inlined_call_operand.vmem [shape: f32[64,2], index: 4, kind: input, shape index: {}]
  %s5 = inlined_call_operand.vmem [shape: f32[1,2], index: 5, kind: input, shape index: {}]
  %s6 = inlined_call_operand.vmem [shape: f32[8,2], index: 6, kind: output, shape index: {}]
  %s7 = sld [smem:[#allocation0]]
  $region34: #{lstms_forward.1} parent=0
    _
  %s9 = ssub.s32 1, %s7
  %s10 = scalar_select 0, %s9, %s7
  // Predicated region
  $region2: #{lstms_forward.1} parent=0 // pred_check
    _
  $region3: #{lstms_forward.1} parent=0 // pred_check_branch
    %12 = sbr.rel (0) target = $region5
  $region4: #{lstms_forward.1} parent=0 // pred_region
    _
  $region5: #{lstms_forward.1} parent=0 // pred_fallthru
    _
  // Predicated region
  $region6: #{lstms_forward.1} parent=0 // pred_check
    _
  $region7: #{lstms_forward.1} parent=0 // pred_check_branch
    %14 = sbr.rel (0) target = $region9
  $region8: #{lstms_forward.1} parent=0 // pred_region
    _
  $region9: #{lstms_forward.1} parent=0 // pred_fallthru
    _
  // Predicated region
  $region10: #{lstms_forward.1} parent=0 // pred_check
    _
  $region11: #{lstms_forward.1} parent=0 // pred_check_branch
    %16 = sbr.rel (0) target = $region13
  $region12: #{lstms_forward.1} parent=0 // pred_region
    _
  $region13: #{lstms_forward.1} parent=0 // pred_fallthru
    _
  // Predicated region
  $region14: #{lstms_forward.1} parent=0 // pred_check
    _
  $region15: #{lstms_forward.1} parent=0 // pred_check_branch
    %18 = sbr.rel (0) target = $region17
  $region16: #{lstms_forward.1} parent=0 // pred_region
    _
  $region17: #{lstms_forward.1} parent=0 // pred_fallthru
    _
  // Predicated region
  $region18: #{lstms_forward.1} parent=0 // pred_check
    _
  $region19: #{lstms_forward.1} parent=0 // pred_check_branch
    %20 = sbr.rel (0) target = $region21
  $region20: #{lstms_forward.1} parent=0 // pred_region
    _
  $region21: #{lstms_forward.1} parent=0 // pred_fallthru
    _
  // Predicated region
  $region22: #{lstms_forward.1} parent=0 // pred_check
    _
  $region23: #{lstms_forward.1} parent=0 // pred_check_branch
    %22 = sbr.rel (0) target = $region25
  $region24: #{lstms_forward.1} parent=0 // pred_region
    _
  $region25: #{lstms_forward.1} parent=0 // pred_fallthru
    _
  %v23 = vld [vmem:[%s0] sm:$0xff]
  %v24 = vld [vmem:[%s0 + $0x8] sm:$0xff]
  %v25 = vld [vmem:[%s0 + $0x10] sm:$0xff]
  %v26 = vld [vmem:[%s0 + $0x18] sm:$0xff]
  %v27 = vld [vmem:[%s0 + $0x20] sm:$0xff]
  %v28 = vld [vmem:[%s0 + $0x28] sm:$0xff]
  %v29 = vld [vmem:[%s0 + $0x30] sm:$0xff]
  %v30 = vld [vmem:[%s0 + $0x38] sm:$0xff]
  %v31 = vld [vmem:[%s1] sm:$0xff]
  %v32 = vld [vmem:[%s1 + $0x8] sm:$0xff]
  %v33 = vld [vmem:[%s1 + $0x10] sm:$0xff]
  %v34 = vld [vmem:[%s1 + $0x18] sm:$0xff]
  %v35 = vld [vmem:[%s1 + $0x20] sm:$0xff]
  %v36 = vld [vmem:[%s1 + $0x28] sm:$0xff]
  %v37 = vld [vmem:[%s1 + $0x30] sm:$0xff]
  %v38 = vld [vmem:[%s1 + $0x38] sm:$0xff]
  %v39 = vld [vmem:[%s3] sm:$0x3]
  %v41 = vperm.slane %v39, 0
  %v42 = vperm.slane %v39, 1
  %vm45 = vcmask 261120
  %v47 = vsel %vm45, %v23, 0
  %v50 = vsel %vm45, %v24, 0
  %v53 = vsel %vm45, %v25, 0
  %v56 = vsel %vm45, %v26, 0
  %v59 = vsel %vm45, %v27, 0
  %v62 = vsel %vm45, %v28, 0
  %v65 = vsel %vm45, %v29, 0
  %v68 = vsel %vm45, %v30, 0
  %70 = vmatpush.msra.mxu0 0.0
  %71 = vmatpush.msra.mxu0 0.0
  %72 = vmatpush.msra.mxu0 0.0
  %73 = vmatpush.msra.mxu0 0.0
  %74 = vmatpush.msra.mxu0 0.0
  %75 = vmatpush.msra.mxu0 0.0
  %76 = vmatpush.msra.mxu0 0.0
  %77 = vmatpush.msra.mxu0 0.0
  %78 = vmatpush.msra.mxu0 0.0
  %79 = vmatpush.msra.mxu0 0.0
  %80 = vmatpush.msra.mxu0 0.0
  %81 = vmatpush.msra.mxu0 0.0
  %82 = vmatpush.msra.mxu0 %v37
  %83 = vmatpush.msra.mxu0 %v35
  %84 = vmatpush.msra.mxu0 %v33
  %85 = vmatpush.msra.mxu0 %v31
  %86 = vmatmul.f32.gmra.mxu0 %v47
  %v87 = vpop.f32.mrf.mxu0
  %v88 = vadd.f32 %v41, %v87
  %89 = vmatmul.f32.gmra.mxu0 %v50
  %v90 = vpop.f32.mrf.mxu0
  %v91 = vadd.f32 %v41, %v90
  %92 = vmatmul.f32.gmra.mxu0 %v53
  %v93 = vpop.f32.mrf.mxu0
  %v94 = vadd.f32 %v41, %v93
  %95 = vmatmul.f32.gmra.mxu0 %v56
  %v96 = vpop.f32.mrf.mxu0
  %v97 = vadd.f32 %v41, %v96
  %98 = vmatmul.f32.gmra.mxu0 %v59
  %v99 = vpop.f32.mrf.mxu0
  %v100 = vadd.f32 %v41, %v99
  %101 = vmatmul.f32.gmra.mxu0 %v62
  %v102 = vpop.f32.mrf.mxu0
  %v103 = vadd.f32 %v41, %v102
  %104 = vmatmul.f32.gmra.mxu0 %v65
  %v105 = vpop.f32.mrf.mxu0
  %v106 = vadd.f32 %v41, %v105
  %107 = vmatmul.f32.gmra.mxu0 %v68
  %v108 = vpop.f32.mrf.mxu0
  %v109 = vadd.f32 %v41, %v108
  %110 = vdwg.mxu0
  %111 = vmatpush.msra.mxu0 0.0
  %112 = vmatpush.msra.mxu0 0.0
  %113 = vmatpush.msra.mxu0 0.0
  %114 = vmatpush.msra.mxu0 0.0
  %115 = vmatpush.msra.mxu0 0.0
  %116 = vmatpush.msra.mxu0 0.0
  %117 = vmatpush.msra.mxu0 0.0
  %118 = vmatpush.msra.mxu0 0.0
  %119 = vmatpush.msra.mxu0 0.0
  %120 = vmatpush.msra.mxu0 0.0
  %121 = vmatpush.msra.mxu0 0.0
  %122 = vmatpush.msra.mxu0 0.0
  %123 = vmatpush.msra.mxu0 %v38
  %124 = vmatpush.msra.mxu0 %v36
  %125 = vmatpush.msra.mxu0 %v34
  %126 = vmatpush.msra.mxu0 %v32
  %127 = vmatmul.f32.gmra.mxu0 %v47
  %v128 = vpop.f32.mrf.mxu0
  %v129 = vadd.f32 %v42, %v128
  %130 = vmatmul.f32.gmra.mxu0 %v50
  %v131 = vpop.f32.mrf.mxu0
  %v132 = vadd.f32 %v42, %v131
  %133 = vmatmul.f32.gmra.mxu0 %v53
  %v134 = vpop.f32.mrf.mxu0
  %v135 = vadd.f32 %v42, %v134
  %136 = vmatmul.f32.gmra.mxu0 %v56
  %v137 = vpop.f32.mrf.mxu0
  %v138 = vadd.f32 %v42, %v137
  %139 = vmatmul.f32.gmra.mxu0 %v59
  %v140 = vpop.f32.mrf.mxu0
  %v141 = vadd.f32 %v42, %v140
  %142 = vmatmul.f32.gmra.mxu0 %v62
  %v143 = vpop.f32.mrf.mxu0
  %v144 = vadd.f32 %v42, %v143
  %145 = vmatmul.f32.gmra.mxu0 %v65
  %v146 = vpop.f32.mrf.mxu0
  %v147 = vadd.f32 %v42, %v146
  %148 = vmatmul.f32.gmra.mxu0 %v68
  %v149 = vpop.f32.mrf.mxu0
  %v150 = vadd.f32 %v42, %v149
  %151 = vdwg.mxu0
  %152 = vst [vmem:[#allocation2] sm:$0xff] %v88
  %153 = vst [vmem:[#allocation2 + $0x8] sm:$0xff] %v129
  %154 = vst [vmem:[#allocation2 + $0x10] sm:$0xff] %v91
  %155 = vst [vmem:[#allocation2 + $0x18] sm:$0xff] %v132
  %156 = vst [vmem:[#allocation2 + $0x20] sm:$0xff] %v94
  %157 = vst [vmem:[#allocation2 + $0x28] sm:$0xff] %v135
  %158 = vst [vmem:[#allocation2 + $0x30] sm:$0xff] %v97
  %159 = vst [vmem:[#allocation2 + $0x38] sm:$0xff] %v138
  %160 = vst [vmem:[#allocation2 + $0x40] sm:$0xff] %v100
  %161 = vst [vmem:[#allocation2 + $0x48] sm:$0xff] %v141
  %162 = vst [vmem:[#allocation2 + $0x50] sm:$0xff] %v103
  %163 = vst [vmem:[#allocation2 + $0x58] sm:$0xff] %v144
  %164 = vst [vmem:[#allocation2 + $0x60] sm:$0xff] %v106
  %165 = vst [vmem:[#allocation2 + $0x68] sm:$0xff] %v147
  %166 = vst [vmem:[#allocation2 + $0x70] sm:$0xff] %v109
  %167 = vst [vmem:[#allocation2 + $0x78] sm:$0xff] %v150
  %v168 = vld [vmem:[%s2] sm:$0xff]
  %v169 = vld [vmem:[%s2 + $0x8] sm:$0xff]
  %v170 = vld [vmem:[%s2 + $0x10] sm:$0xff]
  %v171 = vld [vmem:[%s2 + $0x18] sm:$0xff]
  %v172 = vld [vmem:[%s2 + $0x20] sm:$0xff]
  %v173 = vld [vmem:[%s2 + $0x28] sm:$0xff]
  %v174 = vld [vmem:[%s2 + $0x30] sm:$0xff]
  %v175 = vld [vmem:[%s2 + $0x38] sm:$0xff]
  %v176 = vld [vmem:[%s2 + $0x40] sm:$0xff]
  %v177 = vld [vmem:[%s2 + $0x48] sm:$0xff]
  %v178 = vld [vmem:[%s2 + $0x50] sm:$0xff]
  %v179 = vld [vmem:[%s2 + $0x58] sm:$0xff]
  %v180 = vld [vmem:[%s2 + $0x60] sm:$0xff]
  %v181 = vld [vmem:[%s2 + $0x68] sm:$0xff]
  %v182 = vld [vmem:[%s2 + $0x70] sm:$0xff]
  %v183 = vld [vmem:[%s2 + $0x78] sm:$0xff]
  %v184 = vld [vmem:[#allocation2] sm:$0xff]
  %v185 = vld [vmem:[#allocation2 + $0x8] sm:$0xff]
  %vm186 = vcmask 523264
  %v188 = vsel %vm186, 0.0, 0
  %190 = vmatpush.msra.mxu0 0.0
  %191 = vmatpush.msra.mxu0 0.0
  %192 = vmatpush.msra.mxu0 0.0
  %193 = vmatpush.msra.mxu0 0.0
  %194 = vmatpush.msra.mxu0 0.0
  %195 = vmatpush.msra.mxu0 0.0
  %196 = vmatpush.msra.mxu0 0.0
  %197 = vmatpush.msra.mxu0 0.0
  %198 = vmatpush.msra.mxu0 %v182
  %199 = vmatpush.msra.mxu0 %v180
  %200 = vmatpush.msra.mxu0 %v178
  %201 = vmatpush.msra.mxu0 %v176
  %202 = vmatpush.msra.mxu0 %v174
  %203 = vmatpush.msra.mxu0 %v172
  %204 = vmatpush.msra.mxu0 %v170
  %205 = vmatpush.msra.mxu0 %v168
  %206 = vmatmul.f32.gmra.mxu0 %v188
  %v207 = vpop.f32.mrf.mxu0
  %v208 = vadd.f32 0.0, %v207
  %209 = vdwg.mxu0
  %210 = vmatpush.msra.mxu0 0.0
  %211 = vmatpush.msra.mxu0 0.0
  %212 = vmatpush.msra.mxu0 0.0
  %213 = vmatpush.msra.mxu0 0.0
  %214 = vmatpush.msra.mxu0 0.0
  %215 = vmatpush.msra.mxu0 0.0
  %216 = vmatpush.msra.mxu0 0.0
  %217 = vmatpush.msra.mxu0 0.0
  %218 = vmatpush.msra.mxu0 %v183
  %219 = vmatpush.msra.mxu0 %v181
  %220 = vmatpush.msra.mxu0 %v179
  %221 = vmatpush.msra.mxu0 %v177
  %222 = vmatpush.msra.mxu0 %v175
  %223 = vmatpush.msra.mxu0 %v173
  %224 = vmatpush.msra.mxu0 %v171
  %225 = vmatpush.msra.mxu0 %v169
  %226 = vmatmul.f32.gmra.mxu0 %v188
  %v227 = vpop.f32.mrf.mxu0
  %v228 = vadd.f32 0.0, %v227
  %229 = vdwg.mxu0
  %v230 = vadd.f32 %v184, %v208
  %v231 = vadd.f32 %v185, %v228
  %v232 = vxor.u32 %v230, 2147483648
  %v233 = vmul.f32 %v232, 1.442695
  %v234 = vpow.pop %v233
  %v235 = vadd.f32 %v234, 1.0
  %v236 = vrcp.pop %v235
  %v237 = vmul.f32 %v235, %v236
  %v238 = vsub.f32 1.0, %v237
  %v239 = vmul.f32 %v236, %v238
  %v240 = vadd.f32 %v236, %v239
  %vm241 = vweird.f32 %v235
  %vm242 = vweird.f32 %v236
  %vm243 = vmor %vm241, %vm242
  %v244 = vsel %vm243, %v236, %v240
  %v245 = vand.u32 2147483647, %v235
  %vm246 = vcmp.eq.f32.partialorder %v245, 8.507059e+37
  %v247 = vand.u32 %v235, 2147483648
  %v248 = vor.u32 1.1754944e-38, %v247
  %v249 = vsel %vm246, %v248, %v244
  %v250 = vmul.f32 1.0, %v249
  %v251 = vtanh.pop %v231
  %v252 = vxor.u32 %v231, 2147483648
  %v253 = vmul.f32 %v252, 1.442695
  %v254 = vpow.pop %v253
  %v255 = vadd.f32 %v254, 1.0
  %v256 = vrcp.pop %v255
  %v257 = vmul.f32 %v255, %v256
  %v258 = vsub.f32 1.0, %v257
  %v259 = vmul.f32 %v256, %v258
  %v260 = vadd.f32 %v256, %v259
  %vm261 = vweird.f32 %v255
  %vm262 = vweird.f32 %v256
  %vm263 = vmor %vm261, %vm262
  %v264 = vsel %vm263, %v256, %v260
  %v265 = vand.u32 2147483647, %v255
  %vm266 = vcmp.eq.f32.partialorder %v265, 8.507059e+37
  %v267 = vand.u32 %v255, 2147483648
  %v268 = vor.u32 1.1754944e-38, %v267
  %v269 = vsel %vm266, %v268, %v264
  %v270 = vmul.f32 1.0, %v269
  %v271 = vmul.f32 %v250, 0.0
  %v272 = vmul.f32 %v250, %v251
  %274 = vrot.lane.b32.xlu0 %v272, 64
  %v275 = vpop.permute.xlu0 %274
  %v277 = vadd.f32 %v271, %v275
  %v278 = vtanh.pop %v277
  %v279 = vmul.f32 %v270, %v278
  %s280 = scalar_lea.vmem [#allocation2], 16
  %v281 = vld [vmem:[%s280] sm:$0xff]
  %v282 = vld [vmem:[%s280 + $0x8] sm:$0xff]
  %284 = vrot.lane.b32.xlu0 %v279, 64
  %v285 = vpop.permute.xlu0 %284
  %v286 = vsel %vm186, %v285, 0
  %288 = vmatpush.msra.mxu0 0.0
  %289 = vmatpush.msra.mxu0 0.0
  %290 = vmatpush.msra.mxu0 0.0
  %291 = vmatpush.msra.mxu0 0.0
  %292 = vmatpush.msra.mxu0 0.0
  %293 = vmatpush.msra.mxu0 0.0
  %294 = vmatpush.msra.mxu0 0.0
  %295 = vmatpush.msra.mxu0 0.0
  %296 = vmatpush.msra.mxu0 %v182
  %297 = vmatpush.msra.mxu0 %v180
  %298 = vmatpush.msra.mxu0 %v178
  %299 = vmatpush.msra.mxu0 %v176
  %300 = vmatpush.msra.mxu0 %v174
  %301 = vmatpush.msra.mxu0 %v172
  %302 = vmatpush.msra.mxu0 %v170
  %303 = vmatpush.msra.mxu0 %v168
  %304 = vmatmul.f32.gmra.mxu0 %v286
  %v305 = vpop.f32.mrf.mxu0
  %v306 = vadd.f32 0.0, %v305
  %307 = vdwg.mxu0
  %308 = vmatpush.msra.mxu0 0.0
  %309 = vmatpush.msra.mxu0 0.0
  %310 = vmatpush.msra.mxu0 0.0
  %311 = vmatpush.msra.mxu0 0.0
  %312 = vmatpush.msra.mxu0 0.0
  %313 = vmatpush.msra.mxu0 0.0
  %314 = vmatpush.msra.mxu0 0.0
  %315 = vmatpush.msra.mxu0 0.0
  %316 = vmatpush.msra.mxu0 %v183
  %317 = vmatpush.msra.mxu0 %v181
  %318 = vmatpush.msra.mxu0 %v179
  %319 = vmatpush.msra.mxu0 %v177
  %320 = vmatpush.msra.mxu0 %v175
  %321 = vmatpush.msra.mxu0 %v173
  %322 = vmatpush.msra.mxu0 %v171
  %323 = vmatpush.msra.mxu0 %v169
  %324 = vmatmul.f32.gmra.mxu0 %v286
  %v325 = vpop.f32.mrf.mxu0
  %v326 = vadd.f32 0.0, %v325
  %327 = vdwg.mxu0
  %v328 = vadd.f32 %v281, %v306
  %v329 = vadd.f32 %v282, %v326
  %v330 = vxor.u32 %v328, 2147483648
  %v331 = vmul.f32 %v330, 1.442695
  %v332 = vpow.pop %v331
  %v333 = vadd.f32 %v332, 1.0
  %v334 = vrcp.pop %v333
  %v335 = vmul.f32 %v333, %v334
  %v336 = vsub.f32 1.0, %v335
  %v337 = vmul.f32 %v334, %v336
  %v338 = vadd.f32 %v334, %v337
  %vm339 = vweird.f32 %v333
  %vm340 = vweird.f32 %v334
  %vm341 = vmor %vm339, %vm340
  %v342 = vsel %vm341, %v334, %v338
  %v343 = vand.u32 2147483647, %v333
  %vm344 = vcmp.eq.f32.partialorder %v343, 8.507059e+37
  %v345 = vand.u32 %v333, 2147483648
  %v346 = vor.u32 1.1754944e-38, %v345
  %v347 = vsel %vm344, %v346, %v342
  %v348 = vmul.f32 1.0, %v347
  %v349 = vtanh.pop %v329
  %v350 = vxor.u32 %v329, 2147483648
  %v351 = vmul.f32 %v350, 1.442695
  %v352 = vpow.pop %v351
  %v353 = vadd.f32 %v352, 1.0
  %v354 = vrcp.pop %v353
  %v355 = vmul.f32 %v353, %v354
  %v356 = vsub.f32 1.0, %v355
  %v357 = vmul.f32 %v354, %v356
  %v358 = vadd.f32 %v354, %v357
  %vm359 = vweird.f32 %v353
  %vm360 = vweird.f32 %v354
  %vm361 = vmor %vm359, %vm360
  %v362 = vsel %vm361, %v354, %v358
  %v363 = vand.u32 2147483647, %v353
  %vm364 = vcmp.eq.f32.partialorder %v363, 8.507059e+37
  %v365 = vand.u32 %v353, 2147483648
  %v366 = vor.u32 1.1754944e-38, %v365
  %v367 = vsel %vm364, %v366, %v362
  %v368 = vmul.f32 1.0, %v367
  %v369 = vmul.f32 %v348, %v277
  %v370 = vmul.f32 %v348, %v349
  %372 = vrot.lane.b32.xlu0 %v370, 64
  %v373 = vpop.permute.xlu0 %372
  %v375 = vadd.f32 %v369, %v373
  %v376 = vtanh.pop %v375
  %v377 = vmul.f32 %v368, %v376
  %s378 = scalar_lea.vmem [#allocation2], 32
  %v379 = vld [vmem:[%s378] sm:$0xff]
  %v380 = vld [vmem:[%s378 + $0x8] sm:$0xff]
  %382 = vrot.lane.b32.xlu0 %v377, 64
  %v383 = vpop.permute.xlu0 %382
  %v384 = vsel %vm186, %v383, 0
  %386 = vmatpush.msra.mxu0 0.0
  %387 = vmatpush.msra.mxu0 0.0
  %388 = vmatpush.msra.mxu0 0.0
  %389 = vmatpush.msra.mxu0 0.0
  %390 = vmatpush.msra.mxu0 0.0
  %391 = vmatpush.msra.mxu0 0.0
  %392 = vmatpush.msra.mxu0 0.0
  %393 = vmatpush.msra.mxu0 0.0
  %394 = vmatpush.msra.mxu0 %v182
  %395 = vmatpush.msra.mxu0 %v180
  %396 = vmatpush.msra.mxu0 %v178
  %397 = vmatpush.msra.mxu0 %v176
  %398 = vmatpush.msra.mxu0 %v174
  %399 = vmatpush.msra.mxu0 %v172
  %400 = vmatpush.msra.mxu0 %v170
  %401 = vmatpush.msra.mxu0 %v168
  %402 = vmatmul.f32.gmra.mxu0 %v384
  %v403 = vpop.f32.mrf.mxu0
  %v404 = vadd.f32 0.0, %v403
  %405 = vdwg.mxu0
  %406 = vmatpush.msra.mxu0 0.0
  %407 = vmatpush.msra.mxu0 0.0
  %408 = vmatpush.msra.mxu0 0.0
  %409 = vmatpush.msra.mxu0 0.0
  %410 = vmatpush.msra.mxu0 0.0
  %411 = vmatpush.msra.mxu0 0.0
  %412 = vmatpush.msra.mxu0 0.0
  %413 = vmatpush.msra.mxu0 0.0
  %414 = vmatpush.msra.mxu0 %v183
  %415 = vmatpush.msra.mxu0 %v181
  %416 = vmatpush.msra.mxu0 %v179
  %417 = vmatpush.msra.mxu0 %v177
  %418 = vmatpush.msra.mxu0 %v175
  %419 = vmatpush.msra.mxu0 %v173
  %420 = vmatpush.msra.mxu0 %v171
  %421 = vmatpush.msra.mxu0 %v169
  %422 = vmatmul.f32.gmra.mxu0 %v384
  %v423 = vpop.f32.mrf.mxu0
  %v424 = vadd.f32 0.0, %v423
  %425 = vdwg.mxu0
  %v426 = vadd.f32 %v379, %v404
  %v427 = vadd.f32 %v380, %v424
  %v428 = vxor.u32 %v426, 2147483648
  %v429 = vmul.f32 %v428, 1.442695
  %v430 = vpow.pop %v429
  %v431 = vadd.f32 %v430, 1.0
  %v432 = vrcp.pop %v431
  %v433 = vmul.f32 %v431, %v432
  %v434 = vsub.f32 1.0, %v433
  %v435 = vmul.f32 %v432, %v434
  %v436 = vadd.f32 %v432, %v435
  %vm437 = vweird.f32 %v431
  %vm438 = vweird.f32 %v432
  %vm439 = vmor %vm437, %vm438
  %v440 = vsel %vm439, %v432, %v436
  %v441 = vand.u32 2147483647, %v431
  %vm442 = vcmp.eq.f32.partialorder %v441, 8.507059e+37
  %v443 = vand.u32 %v431, 2147483648
  %v444 = vor.u32 1.1754944e-38, %v443
  %v445 = vsel %vm442, %v444, %v440
  %v446 = vmul.f32 1.0, %v445
  %v447 = vtanh.pop %v427
  %v448 = vxor.u32 %v427, 2147483648
  %v449 = vmul.f32 %v448, 1.442695
  %v450 = vpow.pop %v449
  %v451 = vadd.f32 %v450, 1.0
  %v452 = vrcp.pop %v451
  %v453 = vmul.f32 %v451, %v452
  %v454 = vsub.f32 1.0, %v453
  %v455 = vmul.f32 %v452, %v454
  %v456 = vadd.f32 %v452, %v455
  %vm457 = vweird.f32 %v451
  %vm458 = vweird.f32 %v452
  %vm459 = vmor %vm457, %vm458
  %v460 = vsel %vm459, %v452, %v456
  %v461 = vand.u32 2147483647, %v451
  %vm462 = vcmp.eq.f32.partialorder %v461, 8.507059e+37
  %v463 = vand.u32 %v451, 2147483648
  %v464 = vor.u32 1.1754944e-38, %v463
  %v465 = vsel %vm462, %v464, %v460
  %v466 = vmul.f32 1.0, %v465
  %v467 = vmul.f32 %v446, %v375
  %v468 = vmul.f32 %v446, %v447
  %470 = vrot.lane.b32.xlu0 %v468, 64
  %v471 = vpop.permute.xlu0 %470
  %v473 = vadd.f32 %v467, %v471
  %v474 = vtanh.pop %v473
  %v475 = vmul.f32 %v466, %v474
  %s476 = scalar_lea.vmem [#allocation2], 48
  %v477 = vld [vmem:[%s476] sm:$0xff]
  %v478 = vld [vmem:[%s476 + $0x8] sm:$0xff]
  %480 = vrot.lane.b32.xlu0 %v475, 64
  %v481 = vpop.permute.xlu0 %480
  %v482 = vsel %vm186, %v481, 0
  %484 = vmatpush.msra.mxu0 0.0
  %485 = vmatpush.msra.mxu0 0.0
  %486 = vmatpush.msra.mxu0 0.0
  %487 = vmatpush.msra.mxu0 0.0
  %488 = vmatpush.msra.mxu0 0.0
  %489 = vmatpush.msra.mxu0 0.0
  %490 = vmatpush.msra.mxu0 0.0
  %491 = vmatpush.msra.mxu0 0.0
  %492 = vmatpush.msra.mxu0 %v182
  %493 = vmatpush.msra.mxu0 %v180
  %494 = vmatpush.msra.mxu0 %v178
  %495 = vmatpush.msra.mxu0 %v176
  %496 = vmatpush.msra.mxu0 %v174
  %497 = vmatpush.msra.mxu0 %v172
  %498 = vmatpush.msra.mxu0 %v170
  %499 = vmatpush.msra.mxu0 %v168
  %500 = vmatmul.f32.gmra.mxu0 %v482
  %v501 = vpop.f32.mrf.mxu0
  %v502 = vadd.f32 0.0, %v501
  %503 = vdwg.mxu0
  %504 = vmatpush.msra.mxu0 0.0
  %505 = vmatpush.msra.mxu0 0.0
  %506 = vmatpush.msra.mxu0 0.0
  %507 = vmatpush.msra.mxu0 0.0
  %508 = vmatpush.msra.mxu0 0.0
  %509 = vmatpush.msra.mxu0 0.0
  %510 = vmatpush.msra.mxu0 0.0
  %511 = vmatpush.msra.mxu0 0.0
  %512 = vmatpush.msra.mxu0 %v183
  %513 = vmatpush.msra.mxu0 %v181
  %514 = vmatpush.msra.mxu0 %v179
  %515 = vmatpush.msra.mxu0 %v177
  %516 = vmatpush.msra.mxu0 %v175
  %517 = vmatpush.msra.mxu0 %v173
  %518 = vmatpush.msra.mxu0 %v171
  %519 = vmatpush.msra.mxu0 %v169
  %520 = vmatmul.f32.gmra.mxu0 %v482
  %v521 = vpop.f32.mrf.mxu0
  %v522 = vadd.f32 0.0, %v521
  %523 = vdwg.mxu0
  %v524 = vadd.f32 %v477, %v502
  %v525 = vadd.f32 %v478, %v522
  %v526 = vxor.u32 %v524, 2147483648
  %v527 = vmul.f32 %v526, 1.442695
  %v528 = vpow.pop %v527
  %v529 = vadd.f32 %v528, 1.0
  %v530 = vrcp.pop %v529
  %v531 = vmul.f32 %v529, %v530
  %v532 = vsub.f32 1.0, %v531
  %v533 = vmul.f32 %v530, %v532
  %v534 = vadd.f32 %v530, %v533
  %vm535 = vweird.f32 %v529
  %vm536 = vweird.f32 %v530
  %vm537 = vmor %vm535, %vm536
  %v538 = vsel %vm537, %v530, %v534
  %v539 = vand.u32 2147483647, %v529
  %vm540 = vcmp.eq.f32.partialorder %v539, 8.507059e+37
  %v541 = vand.u32 %v529, 2147483648
  %v542 = vor.u32 1.1754944e-38, %v541
  %v543 = vsel %vm540, %v542, %v538
  %v544 = vmul.f32 1.0, %v543
  %v545 = vtanh.pop %v525
  %v546 = vxor.u32 %v525, 2147483648
  %v547 = vmul.f32 %v546, 1.442695
  %v548 = vpow.pop %v547
  %v549 = vadd.f32 %v548, 1.0
  %v550 = vrcp.pop %v549
  %v551 = vmul.f32 %v549, %v550
  %v552 = vsub.f32 1.0, %v551
  %v553 = vmul.f32 %v550, %v552
  %v554 = vadd.f32 %v550, %v553
  %vm555 = vweird.f32 %v549
  %vm556 = vweird.f32 %v550
  %vm557 = vmor %vm555, %vm556
  %v558 = vsel %vm557, %v550, %v554
  %v559 = vand.u32 2147483647, %v549
  %vm560 = vcmp.eq.f32.partialorder %v559, 8.507059e+37
  %v561 = vand.u32 %v549, 2147483648
  %v562 = vor.u32 1.1754944e-38, %v561
  %v563 = vsel %vm560, %v562, %v558
  %v564 = vmul.f32 1.0, %v563
  %v565 = vmul.f32 %v544, %v473
  %v566 = vmul.f32 %v544, %v545
  %568 = vrot.lane.b32.xlu0 %v566, 64
  %v569 = vpop.permute.xlu0 %568
  %v571 = vadd.f32 %v565, %v569
  %v572 = vtanh.pop %v571
  %v573 = vmul.f32 %v564, %v572
  %s574 = scalar_lea.vmem [#allocation2], 64
  %v575 = vld [vmem:[%s574] sm:$0xff]
  %v576 = vld [vmem:[%s574 + $0x8] sm:$0xff]
  %578 = vrot.lane.b32.xlu0 %v573, 64
  %v579 = vpop.permute.xlu0 %578
  %v580 = vsel %vm186, %v579, 0
  %582 = vmatpush.msra.mxu0 0.0
  %583 = vmatpush.msra.mxu0 0.0
  %584 = vmatpush.msra.mxu0 0.0
  %585 = vmatpush.msra.mxu0 0.0
  %586 = vmatpush.msra.mxu0 0.0
  %587 = vmatpush.msra.mxu0 0.0
  %588 = vmatpush.msra.mxu0 0.0
  %589 = vmatpush.msra.mxu0 0.0
  %590 = vmatpush.msra.mxu0 %v182
  %591 = vmatpush.msra.mxu0 %v180
  %592 = vmatpush.msra.mxu0 %v178
  %593 = vmatpush.msra.mxu0 %v176
  %594 = vmatpush.msra.mxu0 %v174
  %595 = vmatpush.msra.mxu0 %v172
  %596 = vmatpush.msra.mxu0 %v170
  %597 = vmatpush.msra.mxu0 %v168
  %598 = vmatmul.f32.gmra.mxu0 %v580
  %v599 = vpop.f32.mrf.mxu0
  %v600 = vadd.f32 0.0, %v599
  %601 = vdwg.mxu0
  %602 = vmatpush.msra.mxu0 0.0
  %603 = vmatpush.msra.mxu0 0.0
  %604 = vmatpush.msra.mxu0 0.0
  %605 = vmatpush.msra.mxu0 0.0
  %606 = vmatpush.msra.mxu0 0.0
  %607 = vmatpush.msra.mxu0 0.0
  %608 = vmatpush.msra.mxu0 0.0
  %609 = vmatpush.msra.mxu0 0.0
  %610 = vmatpush.msra.mxu0 %v183
  %611 = vmatpush.msra.mxu0 %v181
  %612 = vmatpush.msra.mxu0 %v179
  %613 = vmatpush.msra.mxu0 %v177
  %614 = vmatpush.msra.mxu0 %v175
  %615 = vmatpush.msra.mxu0 %v173
  %616 = vmatpush.msra.mxu0 %v171
  %617 = vmatpush.msra.mxu0 %v169
  %618 = vmatmul.f32.gmra.mxu0 %v580
  %v619 = vpop.f32.mrf.mxu0
  %v620 = vadd.f32 0.0, %v619
  %621 = vdwg.mxu0
  %v622 = vadd.f32 %v575, %v600
  %v623 = vadd.f32 %v576, %v620
  %v624 = vxor.u32 %v622, 2147483648
  %v625 = vmul.f32 %v624, 1.442695
  %v626 = vpow.pop %v625
  %v627 = vadd.f32 %v626, 1.0
  %v628 = vrcp.pop %v627
  %v629 = vmul.f32 %v627, %v628
  %v630 = vsub.f32 1.0, %v629
  %v631 = vmul.f32 %v628, %v630
  %v632 = vadd.f32 %v628, %v631
  %vm633 = vweird.f32 %v627
  %vm634 = vweird.f32 %v628
  %vm635 = vmor %vm633, %vm634
  %v636 = vsel %vm635, %v628, %v632
  %v637 = vand.u32 2147483647, %v627
  %vm638 = vcmp.eq.f32.partialorder %v637, 8.507059e+37
  %v639 = vand.u32 %v627, 2147483648
  %v640 = vor.u32 1.1754944e-38, %v639
  %v641 = vsel %vm638, %v640, %v636
  %v642 = vmul.f32 1.0, %v641
  %v643 = vtanh.pop %v623
  %v644 = vxor.u32 %v623, 2147483648
  %v645 = vmul.f32 %v644, 1.442695
  %v646 = vpow.pop %v645
  %v647 = vadd.f32 %v646, 1.0
  %v648 = vrcp.pop %v647
  %v649 = vmul.f32 %v647, %v648
  %v650 = vsub.f32 1.0, %v649
  %v651 = vmul.f32 %v648, %v650
  %v652 = vadd.f32 %v648, %v651
  %vm653 = vweird.f32 %v647
  %vm654 = vweird.f32 %v648
  %vm655 = vmor %vm653, %vm654
  %v656 = vsel %vm655, %v648, %v652
  %v657 = vand.u32 2147483647, %v647
  %vm658 = vcmp.eq.f32.partialorder %v657, 8.507059e+37
  %v659 = vand.u32 %v647, 2147483648
  %v660 = vor.u32 1.1754944e-38, %v659
  %v661 = vsel %vm658, %v660, %v656
  %v662 = vmul.f32 1.0, %v661
  %v663 = vmul.f32 %v642, %v571
  %v664 = vmul.f32 %v642, %v643
  %666 = vrot.lane.b32.xlu0 %v664, 64
  %v667 = vpop.permute.xlu0 %666
  %v669 = vadd.f32 %v663, %v667
  %v670 = vtanh.pop %v669
  %v671 = vmul.f32 %v662, %v670
  %s672 = scalar_lea.vmem [#allocation2], 80
  %v673 = vld [vmem:[%s672] sm:$0xff]
  %v674 = vld [vmem:[%s672 + $0x8] sm:$0xff]
  %676 = vrot.lane.b32.xlu0 %v671, 64
  %v677 = vpop.permute.xlu0 %676
  %v678 = vsel %vm186, %v677, 0
  %680 = vmatpush.msra.mxu0 0.0
  %681 = vmatpush.msra.mxu0 0.0
  %682 = vmatpush.msra.mxu0 0.0
  %683 = vmatpush.msra.mxu0 0.0
  %684 = vmatpush.msra.mxu0 0.0
  %685 = vmatpush.msra.mxu0 0.0
  %686 = vmatpush.msra.mxu0 0.0
  %687 = vmatpush.msra.mxu0 0.0
  %688 = vmatpush.msra.mxu0 %v182
  %689 = vmatpush.msra.mxu0 %v180
  %690 = vmatpush.msra.mxu0 %v178
  %691 = vmatpush.msra.mxu0 %v176
  %692 = vmatpush.msra.mxu0 %v174
  %693 = vmatpush.msra.mxu0 %v172
  %694 = vmatpush.msra.mxu0 %v170
  %695 = vmatpush.msra.mxu0 %v168
  %696 = vmatmul.f32.gmra.mxu0 %v678
  %v697 = vpop.f32.mrf.mxu0
  %v698 = vadd.f32 0.0, %v697
  %699 = vdwg.mxu0
  %700 = vmatpush.msra.mxu0 0.0
  %701 = vmatpush.msra.mxu0 0.0
  %702 = vmatpush.msra.mxu0 0.0
  %703 = vmatpush.msra.mxu0 0.0
  %704 = vmatpush.msra.mxu0 0.0
  %705 = vmatpush.msra.mxu0 0.0
  %706 = vmatpush.msra.mxu0 0.0
  %707 = vmatpush.msra.mxu0 0.0
  %708 = vmatpush.msra.mxu0 %v183
  %709 = vmatpush.msra.mxu0 %v181
  %710 = vmatpush.msra.mxu0 %v179
  %711 = vmatpush.msra.mxu0 %v177
  %712 = vmatpush.msra.mxu0 %v175
  %713 = vmatpush.msra.mxu0 %v173
  %714 = vmatpush.msra.mxu0 %v171
  %715 = vmatpush.msra.mxu0 %v169
  %716 = vmatmul.f32.gmra.mxu0 %v678
  %v717 = vpop.f32.mrf.mxu0
  %v718 = vadd.f32 0.0, %v717
  %719 = vdwg.mxu0
  %v720 = vadd.f32 %v673, %v698
  %v721 = vadd.f32 %v674, %v718
  %v722 = vxor.u32 %v720, 2147483648
  %v723 = vmul.f32 %v722, 1.442695
  %v724 = vpow.pop %v723
  %v725 = vadd.f32 %v724, 1.0
  %v726 = vrcp.pop %v725
  %v727 = vmul.f32 %v725, %v726
  %v728 = vsub.f32 1.0, %v727
  %v729 = vmul.f32 %v726, %v728
  %v730 = vadd.f32 %v726, %v729
  %vm731 = vweird.f32 %v725
  %vm732 = vweird.f32 %v726
  %vm733 = vmor %vm731, %vm732
  %v734 = vsel %vm733, %v726, %v730
  %v735 = vand.u32 2147483647, %v725
  %vm736 = vcmp.eq.f32.partialorder %v735, 8.507059e+37
  %v737 = vand.u32 %v725, 2147483648
  %v738 = vor.u32 1.1754944e-38, %v737
  %v739 = vsel %vm736, %v738, %v734
  %v740 = vmul.f32 1.0, %v739
  %v741 = vtanh.pop %v721
  %v742 = vxor.u32 %v721, 2147483648
  %v743 = vmul.f32 %v742, 1.442695
  %v744 = vpow.pop %v743
  %v745 = vadd.f32 %v744, 1.0
  %v746 = vrcp.pop %v745
  %v747 = vmul.f32 %v745, %v746
  %v748 = vsub.f32 1.0, %v747
  %v749 = vmul.f32 %v746, %v748
  %v750 = vadd.f32 %v746, %v749
  %vm751 = vweird.f32 %v745
  %vm752 = vweird.f32 %v746
  %vm753 = vmor %vm751, %vm752
  %v754 = vsel %vm753, %v746, %v750
  %v755 = vand.u32 2147483647, %v745
  %vm756 = vcmp.eq.f32.partialorder %v755, 8.507059e+37
  %v757 = vand.u32 %v745, 2147483648
  %v758 = vor.u32 1.1754944e-38, %v757
  %v759 = vsel %vm756, %v758, %v754
  %v760 = vmul.f32 1.0, %v759
  %v761 = vmul.f32 %v740, %v669
  %v762 = vmul.f32 %v740, %v741
  %764 = vrot.lane.b32.xlu0 %v762, 64
  %v765 = vpop.permute.xlu0 %764
  %v767 = vadd.f32 %v761, %v765
  %v768 = vtanh.pop %v767
  %v769 = vmul.f32 %v760, %v768
  %s770 = scalar_lea.vmem [#allocation2], 96
  %v771 = vld [vmem:[%s770] sm:$0xff]
  %v772 = vld [vmem:[%s770 + $0x8] sm:$0xff]
  %774 = vrot.lane.b32.xlu0 %v769, 64
  %v775 = vpop.permute.xlu0 %774
  %v776 = vsel %vm186, %v775, 0
  %778 = vmatpush.msra.mxu0 0.0
  %779 = vmatpush.msra.mxu0 0.0
  %780 = vmatpush.msra.mxu0 0.0
  %781 = vmatpush.msra.mxu0 0.0
  %782 = vmatpush.msra.mxu0 0.0
  %783 = vmatpush.msra.mxu0 0.0
  %784 = vmatpush.msra.mxu0 0.0
  %785 = vmatpush.msra.mxu0 0.0
  %786 = vmatpush.msra.mxu0 %v182
  %787 = vmatpush.msra.mxu0 %v180
  %788 = vmatpush.msra.mxu0 %v178
  %789 = vmatpush.msra.mxu0 %v176
  %790 = vmatpush.msra.mxu0 %v174
  %791 = vmatpush.msra.mxu0 %v172
  %792 = vmatpush.msra.mxu0 %v170
  %793 = vmatpush.msra.mxu0 %v168
  %794 = vmatmul.f32.gmra.mxu0 %v776
  %v795 = vpop.f32.mrf.mxu0
  %v796 = vadd.f32 0.0, %v795
  %797 = vdwg.mxu0
  %798 = vmatpush.msra.mxu0 0.0
  %799 = vmatpush.msra.mxu0 0.0
  %800 = vmatpush.msra.mxu0 0.0
  %801 = vmatpush.msra.mxu0 0.0
  %802 = vmatpush.msra.mxu0 0.0
  %803 = vmatpush.msra.mxu0 0.0
  %804 = vmatpush.msra.mxu0 0.0
  %805 = vmatpush.msra.mxu0 0.0
  %806 = vmatpush.msra.mxu0 %v183
  %807 = vmatpush.msra.mxu0 %v181
  %808 = vmatpush.msra.mxu0 %v179
  %809 = vmatpush.msra.mxu0 %v177
  %810 = vmatpush.msra.mxu0 %v175
  %811 = vmatpush.msra.mxu0 %v173
  %812 = vmatpush.msra.mxu0 %v171
  %813 = vmatpush.msra.mxu0 %v169
  %814 = vmatmul.f32.gmra.mxu0 %v776
  %v815 = vpop.f32.mrf.mxu0
  %v816 = vadd.f32 0.0, %v815
  %817 = vdwg.mxu0
  %v818 = vadd.f32 %v771, %v796
  %v819 = vadd.f32 %v772, %v816
  %v820 = vxor.u32 %v818, 2147483648
  %v821 = vmul.f32 %v820, 1.442695
  %v822 = vpow.pop %v821
  %v823 = vadd.f32 %v822, 1.0
  %v824 = vrcp.pop %v823
  %v825 = vmul.f32 %v823, %v824
  %v826 = vsub.f32 1.0, %v825
  %v827 = vmul.f32 %v824, %v826
  %v828 = vadd.f32 %v824, %v827
  %vm829 = vweird.f32 %v823
  %vm830 = vweird.f32 %v824
  %vm831 = vmor %vm829, %vm830
  %v832 = vsel %vm831, %v824, %v828
  %v833 = vand.u32 2147483647, %v823
  %vm834 = vcmp.eq.f32.partialorder %v833, 8.507059e+37
  %v835 = vand.u32 %v823, 2147483648
  %v836 = vor.u32 1.1754944e-38, %v835
  %v837 = vsel %vm834, %v836, %v832
  %v838 = vmul.f32 1.0, %v837
  %v839 = vtanh.pop %v819
  %v840 = vxor.u32 %v819, 2147483648
  %v841 = vmul.f32 %v840, 1.442695
  %v842 = vpow.pop %v841
  %v843 = vadd.f32 %v842, 1.0
  %v844 = vrcp.pop %v843
  %v845 = vmul.f32 %v843, %v844
  %v846 = vsub.f32 1.0, %v845
  %v847 = vmul.f32 %v844, %v846
  %v848 = vadd.f32 %v844, %v847
  %vm849 = vweird.f32 %v843
  %vm850 = vweird.f32 %v844
  %vm851 = vmor %vm849, %vm850
  %v852 = vsel %vm851, %v844, %v848
  %v853 = vand.u32 2147483647, %v843
  %vm854 = vcmp.eq.f32.partialorder %v853, 8.507059e+37
  %v855 = vand.u32 %v843, 2147483648
  %v856 = vor.u32 1.1754944e-38, %v855
  %v857 = vsel %vm854, %v856, %v852
  %v858 = vmul.f32 1.0, %v857
  %v859 = vmul.f32 %v838, %v767
  %v860 = vmul.f32 %v838, %v839
  %862 = vrot.lane.b32.xlu0 %v860, 64
  %v863 = vpop.permute.xlu0 %862
  %v865 = vadd.f32 %v859, %v863
  %v866 = vtanh.pop %v865
  %v867 = vmul.f32 %v858, %v866
  %s868 = scalar_lea.vmem [#allocation2], 112
  %v869 = vld [vmem:[%s868] sm:$0xff]
  %v870 = vld [vmem:[%s868 + $0x8] sm:$0xff]
  %872 = vrot.lane.b32.xlu0 %v867, 64
  %v873 = vpop.permute.xlu0 %872
  %v874 = vsel %vm186, %v873, 0
  %876 = vmatpush.msra.mxu0 0.0
  %877 = vmatpush.msra.mxu0 0.0
  %878 = vmatpush.msra.mxu0 0.0
  %879 = vmatpush.msra.mxu0 0.0
  %880 = vmatpush.msra.mxu0 0.0
  %881 = vmatpush.msra.mxu0 0.0
  %882 = vmatpush.msra.mxu0 0.0
  %883 = vmatpush.msra.mxu0 0.0
  %884 = vmatpush.msra.mxu0 %v182
  %885 = vmatpush.msra.mxu0 %v180
  %886 = vmatpush.msra.mxu0 %v178
  %887 = vmatpush.msra.mxu0 %v176
  %888 = vmatpush.msra.mxu0 %v174
  %889 = vmatpush.msra.mxu0 %v172
  %890 = vmatpush.msra.mxu0 %v170
  %891 = vmatpush.msra.mxu0 %v168
  %892 = vmatmul.f32.gmra.mxu0 %v874
  %v893 = vpop.f32.mrf.mxu0
  %v894 = vadd.f32 0.0, %v893
  %895 = vdwg.mxu0
  %896 = vmatpush.msra.mxu0 0.0
  %897 = vmatpush.msra.mxu0 0.0
  %898 = vmatpush.msra.mxu0 0.0
  %899 = vmatpush.msra.mxu0 0.0
  %900 = vmatpush.msra.mxu0 0.0
  %901 = vmatpush.msra.mxu0 0.0
  %902 = vmatpush.msra.mxu0 0.0
  %903 = vmatpush.msra.mxu0 0.0
  %904 = vmatpush.msra.mxu0 %v183
  %905 = vmatpush.msra.mxu0 %v181
  %906 = vmatpush.msra.mxu0 %v179
  %907 = vmatpush.msra.mxu0 %v177
  %908 = vmatpush.msra.mxu0 %v175
  %909 = vmatpush.msra.mxu0 %v173
  %910 = vmatpush.msra.mxu0 %v171
  %911 = vmatpush.msra.mxu0 %v169
  %912 = vmatmul.f32.gmra.mxu0 %v874
  %v913 = vpop.f32.mrf.mxu0
  %v914 = vadd.f32 0.0, %v913
  %915 = vdwg.mxu0
  %v916 = vadd.f32 %v869, %v894
  %v917 = vadd.f32 %v870, %v914
  %v918 = vxor.u32 %v916, 2147483648
  %v919 = vmul.f32 %v918, 1.442695
  %v920 = vpow.pop %v919
  %v921 = vadd.f32 %v920, 1.0
  %v922 = vrcp.pop %v921
  %v923 = vmul.f32 %v921, %v922
  %v924 = vsub.f32 1.0, %v923
  %v925 = vmul.f32 %v922, %v924
  %v926 = vadd.f32 %v922, %v925
  %vm927 = vweird.f32 %v921
  %vm928 = vweird.f32 %v922
  %vm929 = vmor %vm927, %vm928
  %v930 = vsel %vm929, %v922, %v926
  %v931 = vand.u32 2147483647, %v921
  %vm932 = vcmp.eq.f32.partialorder %v931, 8.507059e+37
  %v933 = vand.u32 %v921, 2147483648
  %v934 = vor.u32 1.1754944e-38, %v933
  %v935 = vsel %vm932, %v934, %v930
  %v936 = vmul.f32 1.0, %v935
  %v937 = vtanh.pop %v917
  %v938 = vmul.f32 %v936, %v865
  %v939 = vmul.f32 %v936, %v937
  %941 = vrot.lane.b32.xlu0 %v939, 64
  %v942 = vpop.permute.xlu0 %941
  %v944 = vadd.f32 %v938, %v942
  %v945 = vld [vmem:[%s4] sm:$0xff]
  %v946 = vld [vmem:[%s4 + $0x8] sm:$0xff]
  %v947 = vld [vmem:[%s4 + $0x10] sm:$0xff]
  %v948 = vld [vmem:[%s4 + $0x18] sm:$0xff]
  %v949 = vld [vmem:[%s4 + $0x20] sm:$0xff]
  %v950 = vld [vmem:[%s4 + $0x28] sm:$0xff]
  %v951 = vld [vmem:[%s4 + $0x30] sm:$0xff]
  %v952 = vld [vmem:[%s4 + $0x38] sm:$0xff]
  %v953 = vld [vmem:[%s5] sm:$0x1]
  %v955 = vperm.slane %v953, 0
  %958 = vrot.lane.b32.xlu0 %v944, 64
  %v959 = vpop.permute.xlu0 %958
  %v960 = vsel %vm186, %v959, 0
  %962 = vmatpush.msra.mxu0 0.0
  %963 = vmatpush.msra.mxu0 0.0
  %964 = vmatpush.msra.mxu0 0.0
  %965 = vmatpush.msra.mxu0 0.0
  %966 = vmatpush.msra.mxu0 0.0
  %967 = vmatpush.msra.mxu0 0.0
  %968 = vmatpush.msra.mxu0 0.0
  %969 = vmatpush.msra.mxu0 0.0
  %970 = vmatpush.msra.mxu0 %v952
  %971 = vmatpush.msra.mxu0 %v951
  %972 = vmatpush.msra.mxu0 %v950
  %973 = vmatpush.msra.mxu0 %v949
  %974 = vmatpush.msra.mxu0 %v948
  %975 = vmatpush.msra.mxu0 %v947
  %976 = vmatpush.msra.mxu0 %v946
  %977 = vmatpush.msra.mxu0 %v945
  %978 = vmatmul.f32.gmra.mxu0 %v960
  %v979 = vpop.f32.mrf.mxu0
  %v980 = vadd.f32 %v955, %v979
  %981 = vdwg.mxu0
  %vm982 = vcmask 15360
  %983 = vst.msk [vmem:[%s6] sm:$0xff] %vm982, %v980
  // Predicated region
  $region26: #{lstms_forward.1} parent=0 // pred_check
    _
  $region27: #{lstms_forward.1} parent=0 // pred_check_branch
    %985 = sbr.rel (0) target = $region29
  $region28: #{lstms_forward.1} parent=0 // pred_region
    _
  $region29: #{lstms_forward.1} parent=0 // pred_fallthru
    _
  // Predicated region
  $region30: #{lstms_forward.1} parent=0 // pred_check
    _
  $region31: #{lstms_forward.1} parent=0 // pred_check_branch
    %987 = sbr.rel (0) target = $region33
  $region32: #{lstms_forward.1} parent=0 // pred_region
    _
  $region33: #{lstms_forward.1} parent=0 // pred_fallthru
    _

</llo_original>
